<compile_context>
chip_gen: v6e
topology: v6e:2x2x1
jax: 0.10.0
libtpu: 0.0.40
codegen_flags: <defaults>
</compile_context>

<pallas_src>
import jax
import jax.numpy as jnp
from jax.experimental import pallas as pl
from jax.experimental.pallas import tpu as pltpu


_LANE_CANDIDATES = (4096, 2048, 1024, 512, 256, 128)  # lane-dense widths
_TARGET_TILE_BYTES = 4 * 1024 * 1024   # ~4 MiB per block (per buffer)
_VMEM_LIMIT_BYTES = 32 * 1024 * 1024   # explicit; >= usage, fits every gen
_SMALL_INPUT_BYTES = 1 * 1024 * 1024   # below this, plain jnp wins


def _relu_kernel(x_ref, o_ref):
    # Elementwise ReLU on the resident VMEM tile (VPU op).
    o_ref[...] = jnp.maximum(x_ref[...], jnp.zeros((), x_ref.dtype))


def _pick_row_tile(num_rows, row_bytes):
    """Largest multiple-of-8 row tile giving ~_TARGET_TILE_BYTES per block,
    biased toward an even number of grid steps (v7x megacore split)."""
    tb = max(1, _TARGET_TILE_BYTES // max(row_bytes, 1))
    if tb >= num_rows:
        return num_rows                      # single full-extent block
    tb = max(8, (tb // 8) * 8)               # (8,128) sublane rule
    steps = pl.cdiv(num_rows, tb)
    if steps > 1 and steps % 2 == 1:
        # Try one extra step so the parallel axis splits evenly across 2 TCs.
        alt = pl.cdiv(num_rows, steps + 1)
        alt = max(8, ((alt + 7) // 8) * 8)
        if pl.cdiv(num_rows, alt) % 2 == 0:
            tb = alt
    return tb


def _relu_pallas_2d(x2, in_place):
    rows, cols = x2.shape
    tb = _pick_row_tile(rows, cols * x2.dtype.itemsize)
    grid = (pl.cdiv(rows, tb),)
    extra = {"input_output_aliases": {0: 0}} if in_place else {}
    return pl.pallas_call(
        _relu_kernel,
        out_shape=jax.ShapeDtypeStruct((rows, cols), x2.dtype),
        grid_spec=pl.GridSpec(
            grid=grid,
            in_specs=[pl.BlockSpec((tb, cols), lambda i: (i, 0))],
            out_specs=pl.BlockSpec((tb, cols), lambda i: (i, 0)),
        ),
        compiler_params=pltpu.CompilerParams(
            dimension_semantics=("parallel",),
            vmem_limit_bytes=_VMEM_LIMIT_BYTES,
        ),
        **extra,
    )(x2)


def relu_mm_forward(x, *, force_pallas=False, in_place=False):
    """Pallas implementation of ReluMM.forward (Monte Carlo mode).

    Args:
        x: f32[batch, d_in] (any floating dtype / rank works; ReLU is
           elementwise, so the kernel runs on a lane-dense 2-D view).
        force_pallas: run the Pallas kernel even for tiny inputs.
        in_place: alias the output onto the input buffer (only if the caller
           does not need x afterwards).
    Returns:
        max(x, 0) with the same shape/dtype as x.
    """
    n_bytes = x.size * x.dtype.itemsize
    if not force_pallas and n_bytes < _SMALL_INPUT_BYTES:
        # Launch + pipeline prologue would dominate; let XLA fuse it.
        return jnp.maximum(x, jnp.zeros((), x.dtype))

    orig_shape = x.shape
    n = x.size
    lane = next((l for l in _LANE_CANDIDATES if n % l == 0), None)
    if lane is not None:
        x2 = x.reshape(n // lane, lane)          # lane-dense view
    elif x.ndim >= 2:
        x2 = x.reshape(-1, x.shape[-1])          # fallback: keep last dim
    else:
        x2 = x.reshape(1, n)
    y2 = _relu_pallas_2d(x2, in_place)
    return y2.reshape(orig_shape)


# TODO(synk): ReluMM.next_moments / jac (moment-matching mode, erf/asin math on
# the covariance) are separate methods, not part of forward(), and are not
# implemented here.


if __name__ == "__main__":
    key = jax.random.PRNGKey(0)
    batch, d_in = 16, 256  # small shape consistent with (batch_size, d_in)
    x = jax.random.normal(key, (batch, d_in), dtype=jnp.float32)
    y_ref = jnp.maximum(x, 0.0)

    # Exercise the Pallas path even at this tiny size.
    y = relu_mm_forward(x, force_pallas=True)
    jax.block_until_ready(y)
    assert y.shape == (batch, d_in) and y.dtype == jnp.float32
    assert bool(jnp.allclose(y, y_ref)), "mismatch vs reference ReLU (pallas)"

    # Default path for tiny inputs bypasses Pallas; must still be correct.
    y_small = relu_mm_forward(x)
    assert bool(jnp.allclose(y_small, y_ref)), "mismatch vs reference ReLU (fallback)"

    # Multi-block, lane-dense path (even # of grid steps) on a modest shape.
    x_big = jax.random.normal(jax.random.PRNGKey(1), (4096, 1024), jnp.float32)
    y_big = relu_mm_forward(x_big)
    jax.block_until_ready(y_big)
    assert bool(jnp.allclose(y_big, jnp.maximum(x_big, 0.0))), "mismatch (big)"

    print("KERNEL_OK")
</pallas_src>

<mosaic_0001>
module attributes {stable_mosaic.version = 11 : i64} {
  func.func @_relu_kernel(%arg0: i32, %arg1: memref<1x4096xf32, #tpu.memory_space<vmem>>, %arg2: memref<1x4096xf32, #tpu.memory_space<vmem>>) attributes {dimension_semantics = [#tpu.dimension_semantics<parallel>], iteration_bounds = array<i64: 1>, scalar_prefetch = 0 : i64, scratch_operands = 0 : i64, tpu.core_type = #tpu.core_type<tc>, window_params = [{transform_indices = @transform_0, window_bounds = array<i64: 1, 4096>}, {transform_indices = @transform_1, window_bounds = array<i64: 1, 4096>}]} {
    %c0 = arith.constant 0 : index
    %c0_0 = arith.constant 0 : index
    %0 = vector.load %arg1[%c0, %c0_0] : memref<1x4096xf32, #tpu.memory_space<vmem>>, vector<1x4096xf32>
    %cst = arith.constant 0.000000e+00 : f32
    %1 = vector.broadcast %cst : f32 to vector<1x4096xf32>
    %2 = arith.maximumf %0, %1 : vector<1x4096xf32>
    %c0_1 = arith.constant 0 : index
    %c0_2 = arith.constant 0 : index
    %3 = vector.load %arg2[%c0_1, %c0_2] : memref<1x4096xf32, #tpu.memory_space<vmem>>, vector<1x4096xf32>
    tpu.vector_store %arg2[%c0_1, %c0_2], %2 {strides = array<i32>} : memref<1x4096xf32, #tpu.memory_space<vmem>>, vector<1x4096xf32>,
    return
  }
  func.func @transform_0(%arg0: i32) -> (i32, i32) {
    %c0_i32 = arith.constant 0 : i32
    %c0_i32_0 = arith.constant 0 : i32
    return %arg0, %c0_i32 : i32, i32
  }
  func.func @transform_1(%arg0: i32) -> (i32, i32) {
    %c0_i32 = arith.constant 0 : i32
    %c0_i32_0 = arith.constant 0 : i32
    return %arg0, %c0_i32 : i32, i32
  }
}

</mosaic_0001>

<llo_original>
// kernel: tpu_custom_call.1
$region0: #{tpu_custom_call.1}
  #allocation0 [shape = 'u32[]', space=smem, size = 0x4, offset = 0x4, fixed_abs, tag = 'smem constant byte address 0x4 - core index']
  #allocation1 [shape = 'u32[144,128]{1,0:T(1,128)}', space=vmem, size = 0x12000, scoped, tag = 'internal scratch']
  %s0 = inlined_call_operand.hbm [shape: f32[1,4096], index: 0, kind: input, shape index: {}]
  %s1 = inlined_call_operand.hbm [shape: f32[1,4096], index: 1, kind: output, shape index: {}]
  %s2 = sld [smem:[#allocation0]]
  $region18: #{tpu_custom_call.1} parent=0
    _
  %s4 = ssub.s32 1, %s2
  %s5 = scalar_select 0, %s4, %s2
  $region1: #{tpu_custom_call.1} parent=0
    #allocation2 [shape = 'u8[16384]{0}', space=vmem, size = 0x4000, scoped, tag = 'input window, operand 0, single buffered']
    #allocation3 [shape = 's32[1]{0}', space=sflag, size = 0x4, scoped, tag = 'scoped memory for tpu_custom_call.1']
    #allocation4 [shape = 's32[1]{0}', space=sflag, size = 0x4, scoped, tag = 'scoped memory for tpu_custom_call.1']
    #allocation5 [shape = 'u8[16384]{0}', space=vmem, size = 0x4000, scoped, tag = 'output window, operand 0, single buffered']
    %6 = vsyncpa [#allocation3], 0
    %7 = vsyncpa [#allocation4], 0
    // Predicated region
    $region2: #{tpu_custom_call.1} parent=1 // pred_check
      _
    $region3: #{tpu_custom_call.1} parent=1 // pred_check_branch
      %9 = sbr.rel (0) target = $region5
    $region4: #{tpu_custom_call.1} parent=1 // pred_region
      %s11 = ssub.s32 512, 512
      %12 = vsyncadd [#allocation3], %s11
      %s14 = sshll.u32 [#allocation2], 4
      %s15 = int_to_ptr.vmem [resolvable:$true] %s14
      %17 = dma.hbm_to_vmem [thread:$0]  %s0, 512, %s15, [#allocation3]
    $region5: #{tpu_custom_call.1} parent=1 // pred_fallthru
      _
    // Predicated region
    $region6: #{tpu_custom_call.1} parent=1 // pred_check
      _
    $region7: #{tpu_custom_call.1} parent=1 // pred_check_branch
      %19 = sbr.rel (0) target = $region9
    $region8: #{tpu_custom_call.1} parent=1 // pred_region
      %20 = dma.done [#allocation3], 512
    $region9: #{tpu_custom_call.1} parent=1 // pred_fallthru
      _
    %v21 = vld [vmem:[#allocation2] sm:$0xff]
    %v22 = vld [vmem:[#allocation2 + $0x8] sm:$0xff]
    %v23 = vld [vmem:[#allocation2 + $0x10] sm:$0xff]
    %v24 = vld [vmem:[#allocation2 + $0x18] sm:$0xff]
    %v25 = vmax.f32 %v21, 0.0
    %v26 = vmax.f32 %v22, 0.0
    %v27 = vmax.f32 %v23, 0.0
    %v28 = vmax.f32 %v24, 0.0
    %29 = vst [vmem:[#allocation5] sm:$0xff] %v25
    %30 = vst [vmem:[#allocation5 + $0x8] sm:$0xff] %v26
    %31 = vst [vmem:[#allocation5 + $0x10] sm:$0xff] %v27
    %32 = vst [vmem:[#allocation5 + $0x18] sm:$0xff] %v28
    // Predicated region
    $region10: #{tpu_custom_call.1} parent=1 // pred_check
      _
    $region11: #{tpu_custom_call.1} parent=1 // pred_check_branch
      %34 = sbr.rel (0) target = $region13
    $region12: #{tpu_custom_call.1} parent=1 // pred_region
      %s36 = ssub.s32 512, 512
      %37 = vsyncadd [#allocation4], %s36
      %s39 = sshll.u32 [#allocation5], 4
      %s40 = int_to_ptr.vmem [resolvable:$true] %s39
      %42 = dma.vmem_to_hbm [thread:$0]  %s40, 512, %s1, [#allocation4]
    $region13: #{tpu_custom_call.1} parent=1 // pred_fallthru
      _
    // Predicated region
    $region14: #{tpu_custom_call.1} parent=1 // pred_check
      _
    $region15: #{tpu_custom_call.1} parent=1 // pred_check_branch
      %44 = sbr.rel (0) target = $region17
    $region16: #{tpu_custom_call.1} parent=1 // pred_region
      %45 = dma.done [#allocation4], 512
    $region17: #{tpu_custom_call.1} parent=1 // pred_fallthru
      _
    %46 = vsyncpa [#allocation3], 1
    %47 = vsyncpa [#allocation4], 1

</llo_original>
